<compile_context>
chip_gen: v7x
topology: tpu7x:2x2x1
jax: 0.10.0
libtpu: 0.0.40
codegen_flags: <defaults>
</compile_context>

<pallas_src>
import jax
import jax.numpy as jnp
from jax import lax
from jax.experimental import pallas as pl
from jax.experimental.pallas import tpu as pltpu

N_FEATURES = 20
K_AUG = 24            # 20 features + 1 ones column + 3 zero pad (multiple of 8)
P_ROWS = 48           # packed param slab rows


def fancy_mlp_kernel(x_ref, p_ref, out_ref):
    x = x_ref[...]                                        # (N, 24)  [x | 1 | 0 0 0]
    w1 = p_ref[0:K_AUG, :]                                # (24, 20) [W.T@rw ; b@rw+1 ; 0]
    wt = p_ref[K_AUG:K_AUG + N_FEATURES, :]               # (20, 20) W.T
    b = p_ref[K_AUG + N_FEATURES:K_AUG + N_FEATURES + 1, :]   # (1, 20)

    # relu(linear(x) @ rand_weight + 1): bias folded into the matmul via the ones column.
    h = jnp.maximum(jnp.dot(x, w1, preferred_element_type=jnp.float32), 0.0)
    # Second application of the shared Linear layer: h @ W.T + b
    h = jnp.dot(h, wt, preferred_element_type=jnp.float32) + b

    # Reduce once; everything below is (1,1)-sized.
    s1 = jnp.sum(h, axis=(0, 1), keepdims=True)           # sum(h)
    s2 = jnp.sum(h * h, axis=(0, 1), keepdims=True)       # ||h||^2
    norm = jnp.sqrt(s2)                                   # Frobenius norm

    # while norm > 1: norm /= 2   -- halving is exact in fp32, so the count k
    # is a pure function of norm.  With norm = m * 2^e, 1 <= m < 2:
    #   k = max(0, e)      if m == 1
    #   k = max(0, e + 1)  otherwise
    bits = pltpu.bitcast(norm, jnp.int32)                 # norm >= 0
    e = ((bits >> 23) & 0xFF) - 127
    mant_nz = ((bits & 0x7FFFFF) != 0).astype(jnp.int32)
    k = jnp.maximum(e + mant_nz, 0)

    # 2^-k split into two exact power-of-two factors, built from exponent bits
    # and applied sequentially (keeps every intermediate normal up to k~252).
    k_hi = k >> 1
    k_lo = k - k_hi
    f_hi = pltpu.bitcast((127 - k_hi) << 23, jnp.float32)
    f_lo = pltpu.bitcast((127 - k_lo) << 23, jnp.float32)

    norm_f = (norm * f_hi) * f_lo                         # exact power-of-two muls
    res = ((s1 * f_hi) * f_lo) * jnp.where(norm_f < 0.8, 10.0, 1.0)

    # Scalar result via reduce-to-scalar (well supported), written to SMEM.
    out_ref[0, 0] = jnp.sum(res)


def fancy_mlp(x, w, b, rw):
    """x: (N, 20); w: (20, 20) torch-layout (out, in); b: (20,); rw: (20, 20)."""
    x = x.astype(jnp.float32)
    w = w.astype(jnp.float32)
    b_row = b.reshape(1, -1).astype(jnp.float32)
    rw = rw.astype(jnp.float32)
    n = x.shape[0]

    # Constant folding outside the kernel (weights are static across calls):
    w_t = w.T                       # (in, out): kernel uses h @ w_t (no in-kernel transpose)
    w_fused = w_t @ rw              # (20, 20):  x @ w_fused == (x @ W.T) @ rand_weight
    b_fused = b_row @ rw + 1.0      # (1, 20)

    # Augmented input: [x | 1 | 0 0 0]  -- the ones column carries b_fused.
    x_aug = jnp.concatenate(
        [x, jnp.ones((n, 1), jnp.float32), jnp.zeros((n, 3), jnp.float32)], axis=1)

    # Single packed parameter slab (48, 20): one DMA for every weight/bias.
    params = jnp.concatenate(
        [w_fused, b_fused, jnp.zeros((3, N_FEATURES), jnp.float32),
         w_t, b_row, jnp.zeros((3, N_FEATURES), jnp.float32)], axis=0)
    assert params.shape == (P_ROWS, N_FEATURES)

    flops = (2 * n * K_AUG * N_FEATURES          # first matmul (bias fused)
             + 2 * n * N_FEATURES * N_FEATURES   # second matmul
             + 6 * n * N_FEATURES)               # relu / bias / square / reduces
    bytes_accessed = 4 * (x_aug.size + params.size + 1)

    vmem = pl.BlockSpec(memory_space=pltpu.MemorySpace.VMEM)
    out = pl.pallas_call(
        fancy_mlp_kernel,
        out_shape=jax.ShapeDtypeStruct((1, 1), jnp.float32),
        in_specs=[vmem, vmem],
        out_specs=pl.BlockSpec(memory_space=pltpu.MemorySpace.SMEM),
        cost_estimate=pl.CostEstimate(
            flops=flops, transcendentals=1, bytes_accessed=bytes_accessed),
    )(x_aug, params)
    return out[0, 0]


def _reference(x, w, b, rw):
    # Pure-JAX reference of the torch forward (unfused), for a sanity check.
    h = x @ w.T + b
    h = jnp.maximum(h @ rw + 1.0, 0.0)
    h = h @ w.T + b
    n = jnp.linalg.norm(h)

    def cond(c):
        _, nn_ = c
        return nn_ > 1.0

    def body(c):
        hh, nn_ = c
        return hh * 0.5, nn_ * 0.5

    h, n = lax.while_loop(cond, body, (h, n))
    h = jnp.where(n < 0.8, h * 10.0, h)
    return jnp.sum(h)


if __name__ == "__main__":
    key = jax.random.PRNGKey(0)
    k_x, k_w, k_b, k_rw = jax.random.split(key, 4)

    batch = 2
    # Input: like torch.rand(2, 20)
    x = jax.random.uniform(k_x, (batch, N_FEATURES), dtype=jnp.float32)
    # nn.Linear(20, 20) default init: U(-1/sqrt(in), 1/sqrt(in))
    bound = 1.0 / jnp.sqrt(jnp.float32(N_FEATURES))
    w = jax.random.uniform(k_w, (N_FEATURES, N_FEATURES),
                           minval=-bound, maxval=bound, dtype=jnp.float32)
    b = jax.random.uniform(k_b, (N_FEATURES,),
                           minval=-bound, maxval=bound, dtype=jnp.float32)
    # self.rand_weight = torch.rand((20, 20))  -> U(0, 1), not trainable
    rw = jax.random.uniform(k_rw, (N_FEATURES, N_FEATURES), dtype=jnp.float32)

    out = fancy_mlp(x, w, b, rw)
    jax.block_until_ready(out)

    ref = _reference(x, w, b.reshape(1, -1), rw)
    assert jnp.allclose(out, ref, rtol=1e-5, atol=1e-5), (out, ref)

    print("KERNEL_OK")
</pallas_src>

<mosaic_0001>
module attributes {stable_mosaic.version = 11 : i64} {
  func.func @fancy_mlp_kernel(%arg0: memref<2x24xf32, #tpu.memory_space<vmem>>, %arg1: memref<48x20xf32, #tpu.memory_space<vmem>>, %arg2: memref<1x1xf32, #tpu.memory_space<smem>>) attributes {dimension_semantics = [], scalar_prefetch = 0 : i64, scratch_operands = 0 : i64, tpu.core_type = #tpu.core_type<tc>} {
    %c0 = arith.constant 0 : index
    %c0_0 = arith.constant 0 : index
    %0 = vector.load %arg0[%c0, %c0_0] : memref<2x24xf32, #tpu.memory_space<vmem>>, vector<2x24xf32>
    %c0_1 = arith.constant 0 : index
    %c0_2 = arith.constant 0 : index
    %1 = vector.load %arg1[%c0_1, %c0_2] : memref<48x20xf32, #tpu.memory_space<vmem>>, vector<24x20xf32>
    %c24 = arith.constant 24 : index
    %c0_3 = arith.constant 0 : index
    %2 = vector.load %arg1[%c24, %c0_3] : memref<48x20xf32, #tpu.memory_space<vmem>>, vector<20x20xf32>
    %c44 = arith.constant 44 : index
    %c0_4 = arith.constant 0 : index
    %3 = vector.load %arg1[%c44, %c0_4] : memref<48x20xf32, #tpu.memory_space<vmem>>, vector<1x20xf32>
    %cst = arith.constant dense<0.000000e+00> : vector<2x20xf32>
    %4 = tpu.matmul %0, %1, %cst {dimension_numbers = #tpu.dot_dimension_numbers<[1], [0], [0], [1], [0, 0, 1, 1], [], []>} : vector<2x24xf32>, vector<24x20xf32>, vector<2x20xf32> -> vector<2x20xf32>
    %cst_5 = arith.constant 0.000000e+00 : f32
    %5 = vector.broadcast %cst_5 : f32 to vector<2x20xf32>
    %6 = arith.maximumf %4, %5 : vector<2x20xf32>
    %cst_6 = arith.constant dense<0.000000e+00> : vector<2x20xf32>
    %7 = tpu.matmul %6, %2, %cst_6 {dimension_numbers = #tpu.dot_dimension_numbers<[1], [0], [0], [1], [0, 0, 1, 1], [], []>} : vector<2x20xf32>, vector<20x20xf32>, vector<2x20xf32> -> vector<2x20xf32>
    %8 = vector.broadcast %3 : vector<1x20xf32> to vector<2x20xf32>
    %9 = arith.addf %7, %8 : vector<2x20xf32>
    %10 = vector.shape_cast %9 : vector<2x20xf32> to vector<1x2x20xf32>
    %cst_7 = arith.constant dense<0.000000e+00> : vector<1xf32>
    %11 = vector.multi_reduction <add>, %10, %cst_7 [1, 2] : vector<1x2x20xf32> to vector<1xf32>
    %12 = vector.shape_cast %11 : vector<1xf32> to vector<1x1x1xf32>
    %13 = vector.extract %12[0, 0, 0] : f32 from vector<1x1x1xf32>
    %14 = vector.broadcast %13 : f32 to vector<1x1xf32>
    %15 = arith.mulf %9, %9 : vector<2x20xf32>
    %16 = vector.shape_cast %15 : vector<2x20xf32> to vector<1x2x20xf32>
    %cst_8 = arith.constant dense<0.000000e+00> : vector<1xf32>
    %17 = vector.multi_reduction <add>, %16, %cst_8 [1, 2] : vector<1x2x20xf32> to vector<1xf32>
    %18 = vector.shape_cast %17 : vector<1xf32> to vector<1x1x1xf32>
    %19 = vector.extract %18[0, 0, 0] : f32 from vector<1x1x1xf32>
    %20 = vector.broadcast %19 : f32 to vector<1x1xf32>
    %21 = math.sqrt %20 : vector<1x1xf32>
    %22 = tpu.bitcast %21 : vector<1x1xf32> -> vector<1x1xi32>
    %c23_i32 = arith.constant 23 : i32
    %23 = vector.broadcast %c23_i32 : i32 to vector<1x1xi32>
    %24 = arith.shrsi %22, %23 : vector<1x1xi32>
    %c255_i32 = arith.constant 255 : i32
    %25 = vector.broadcast %c255_i32 : i32 to vector<1x1xi32>
    %26 = arith.andi %24, %25 : vector<1x1xi32>
    %c127_i32 = arith.constant 127 : i32
    %27 = vector.broadcast %c127_i32 : i32 to vector<1x1xi32>
    %28 = arith.subi %26, %27 : vector<1x1xi32>
    %c8388607_i32 = arith.constant 8388607 : i32
    %29 = vector.broadcast %c8388607_i32 : i32 to vector<1x1xi32>
    %30 = arith.andi %22, %29 : vector<1x1xi32>
    %c0_i32 = arith.constant 0 : i32
    %31 = vector.broadcast %c0_i32 : i32 to vector<1x1xi32>
    %32 = arith.cmpi ne, %30, %31 : vector<1x1xi32>
    %33 = arith.extui %32 : vector<1x1xi1> to vector<1x1xi32>
    %34 = arith.addi %28, %33 : vector<1x1xi32>
    %c0_i32_9 = arith.constant 0 : i32
    %35 = vector.broadcast %c0_i32_9 : i32 to vector<1x1xi32>
    %36 = arith.maxsi %34, %35 : vector<1x1xi32>
    %c1_i32 = arith.constant 1 : i32
    %37 = vector.broadcast %c1_i32 : i32 to vector<1x1xi32>
    %38 = arith.shrsi %36, %37 : vector<1x1xi32>
    %39 = arith.subi %36, %38 : vector<1x1xi32>
    %c127_i32_10 = arith.constant 127 : i32
    %40 = vector.broadcast %c127_i32_10 : i32 to vector<1x1xi32>
    %41 = arith.subi %40, %38 : vector<1x1xi32>
    %c23_i32_11 = arith.constant 23 : i32
    %42 = vector.broadcast %c23_i32_11 : i32 to vector<1x1xi32>
    %43 = arith.shli %41, %42 : vector<1x1xi32>
    %44 = tpu.bitcast %43 : vector<1x1xi32> -> vector<1x1xf32>
    %c127_i32_12 = arith.constant 127 : i32
    %45 = vector.broadcast %c127_i32_12 : i32 to vector<1x1xi32>
    %46 = arith.subi %45, %39 : vector<1x1xi32>
    %c23_i32_13 = arith.constant 23 : i32
    %47 = vector.broadcast %c23_i32_13 : i32 to vector<1x1xi32>
    %48 = arith.shli %46, %47 : vector<1x1xi32>
    %49 = tpu.bitcast %48 : vector<1x1xi32> -> vector<1x1xf32>
    %50 = arith.mulf %21, %44 : vector<1x1xf32>
    %51 = arith.mulf %50, %49 : vector<1x1xf32>
    %52 = arith.mulf %14, %44 : vector<1x1xf32>
    %53 = arith.mulf %52, %49 : vector<1x1xf32>
    %cst_14 = arith.constant 8.000000e-01 : f32
    %54 = vector.broadcast %cst_14 : f32 to vector<1x1xf32>
    %55 = arith.cmpf olt, %51, %54 : vector<1x1xf32>
    %cst_15 = arith.constant 1.000000e+01 : f32
    %cst_16 = arith.constant 1.000000e+00 : f32
    %56 = vector.broadcast %cst_15 : f32 to vector<1x1xf32>
    %57 = vector.broadcast %cst_16 : f32 to vector<1x1xf32>
    %58 = arith.select %55, %56, %57 : vector<1x1xi1>, vector<1x1xf32>
    %59 = arith.mulf %53, %58 : vector<1x1xf32>
    %60 = vector.shape_cast %59 : vector<1x1xf32> to vector<1x1x1xf32>
    %cst_17 = arith.constant dense<0.000000e+00> : vector<1xf32>
    %61 = vector.multi_reduction <add>, %60, %cst_17 [1, 2] : vector<1x1x1xf32> to vector<1xf32>
    %62 = vector.shape_cast %61 : vector<1xf32> to vector<1x1x1xf32>
    %63 = vector.extract %62[0, 0, 0] : f32 from vector<1x1x1xf32>
    %c0_18 = arith.constant 0 : index
    %c0_19 = arith.constant 0 : index
    %64 = memref.load %arg2[%c0_18, %c0_19] : memref<1x1xf32, #tpu.memory_space<smem>>
    memref.store %63, %arg2[%c0_18, %c0_19] : memref<1x1xf32, #tpu.memory_space<smem>>
    return
  }
}

</mosaic_0001>

<llo_original>
// kernel: tpu_custom_call.1
$region0: #{tpu_custom_call.1}
  #allocation0 [shape = 'u32[]', space=smem, size = 0x4, offset = 0x4, fixed_abs, tag = 'smem constant byte address 0x4 - core index']
  #allocation1 [shape = 'u32[144,128]{1,0:T(1,128)}', space=vmem, size = 0x12000, scoped, tag = 'internal scratch']
  %s0 = inlined_call_operand.vmem [shape: f32[2,24], index: 0, kind: input, shape index: {}]
  %s1 = inlined_call_operand.vmem [shape: f32[48,20], index: 1, kind: input, shape index: {}]
  %s2 = inlined_call_operand.hbm [shape: f32[1,1], index: 2, kind: output, shape index: {}]
  %s3 = sld [smem:[#allocation0]]
  $region18: #{tpu_custom_call.1} parent=0
    _
  %s5 = ssub.s32 1, %s3
  %s6 = scalar_select 0, %s5, %s3
  $region1: #{tpu_custom_call.1} parent=0
    #allocation2 [shape = 'u8[512]{0}', space=smem, size = 0x200, scoped, tag = 'output window, operand 0, single buffered']
    #allocation3 [shape = 's32[1]{0}', space=sflag, size = 0x4, scoped, tag = 'scoped memory for tpu_custom_call.1']
    %7 = vsyncpa [#allocation3], 0
    // Predicated region
    $region2: #{tpu_custom_call.1} parent=1 // pred_check
      _
    $region3: #{tpu_custom_call.1} parent=1 // pred_check_branch
      %9 = sbr.rel (0) target = $region5
    $region4: #{tpu_custom_call.1} parent=1 // pred_region
      _
    $region5: #{tpu_custom_call.1} parent=1 // pred_fallthru
      _
    // Predicated region
    $region6: #{tpu_custom_call.1} parent=1 // pred_check
      _
    $region7: #{tpu_custom_call.1} parent=1 // pred_check_branch
      %11 = sbr.rel (0) target = $region9
    $region8: #{tpu_custom_call.1} parent=1 // pred_region
      _
    $region9: #{tpu_custom_call.1} parent=1 // pred_fallthru
      _
    %v12 = vld [vmem:[%s0] sm:$0x3]
    %v13 = vld [vmem:[%s1] sm:$0xff]
    %v14 = vld [vmem:[%s1 + $0x8] sm:$0xff]
    %v15 = vld [vmem:[%s1 + $0x10] sm:$0xff]
    %v16 = vld [vmem:[%s1 + $0x18] sm:$0xff]
    %v17 = vld [vmem:[%s1 + $0x20] sm:$0xff]
    %v18 = vld [vmem:[%s1 + $0x28] sm:$0xf]
    %v19 = vld [vmem:[%s1 + $0x2c] sm:$0x1]
    %vm20 = vcmask 195584
    %v22 = vsel %vm20, %v12, 0
    %24 = vmatprep.subr.mxu0 0.0
    %25 = vmatpush1.msra.mxu0 %v13
    %26 = vmatprep.subr.mxu0 0.0
    %27 = vmatpush1.msra.mxu0 %v14
    %28 = vmatprep.subr.mxu0 0.0
    %29 = vmatpush1.msra.mxu0 %v15
    %30 = vmatprep.subr.mxu0 0.0
    %31 = vmatpush1.msra.mxu0 0.0
    %32 = vmatprep.subr.mxu0 0.0
    %33 = vmatpush1.msra.mxu0 0.0
    %34 = vmatprep.subr.mxu0 0.0
    %35 = vmatpush1.msra.mxu0 0.0
    %36 = vmatprep.subr.mxu0 0.0
    %37 = vmatpush1.msra.mxu0 0.0
    %38 = vmatprep.subr.mxu0 0.0
    %39 = vmatpush1.msra.mxu0 0.0
    %40 = vmatprep.subr.mxu0 0.0
    %41 = vmatpush1.msra.mxu0 0.0
    %42 = vmatprep.subr.mxu0 0.0
    %43 = vmatpush1.msra.mxu0 0.0
    %44 = vmatprep.subr.mxu0 0.0
    %45 = vmatpush1.msra.mxu0 0.0
    %46 = vmatprep.subr.mxu0 0.0
    %47 = vmatpush1.msra.mxu0 0.0
    %48 = vmatprep.subr.mxu0 0.0
    %49 = vmatpush1.msra.mxu0 0.0
    %50 = vmatprep.subr.mxu0 0.0
    %51 = vmatpush1.msra.mxu0 0.0
    %52 = vmatprep.subr.mxu0 0.0
    %53 = vmatpush1.msra.mxu0 0.0
    %54 = vmatprep.subr.mxu0 0.0
    %55 = vmatpush1.msra.mxu0 0.0
    %56 = vmatprep.subr.mxu0 0.0
    %57 = vmatpush1.msra.mxu0 0.0
    %58 = vmatprep.subr.mxu0 0.0
    %59 = vmatpush1.msra.mxu0 0.0
    %60 = vmatprep.subr.mxu0 0.0
    %61 = vmatpush1.msra.mxu0 0.0
    %62 = vmatprep.subr.mxu0 0.0
    %63 = vmatpush1.msra.mxu0 0.0
    %64 = vmatprep.subr.mxu0 0.0
    %65 = vmatpush1.msra.mxu0 0.0
    %66 = vmatprep.subr.mxu0 0.0
    %67 = vmatpush1.msra.mxu0 0.0
    %68 = vmatprep.subr.mxu0 0.0
    %69 = vmatpush1.msra.mxu0 0.0
    %70 = vmatprep.subr.mxu0 0.0
    %71 = vmatpush1.msra.mxu0 0.0
    %72 = vmatprep.subr.mxu0 0.0
    %73 = vmatpush1.msra.mxu0 0.0
    %74 = vmatprep.subr.mxu0 0.0
    %75 = vmatpush1.msra.mxu0 0.0
    %76 = vmatprep.subr.mxu0 0.0
    %77 = vmatpush1.msra.mxu0 0.0
    %78 = vmatprep.subr.mxu0 0.0
    %79 = vmatpush1.msra.mxu0 0.0
    %80 = vmatprep.subr.mxu0 0.0
    %81 = vmatpush1.msra.mxu0 0.0
    %82 = vmatprep.subr.mxu0 0.0
    %83 = vmatpush1.msra.mxu0 0.0
    %84 = vmatprep.subr.mxu0 0.0
    %85 = vmatpush1.msra.mxu0 0.0
    %86 = vmatprep.subr.mxu0 0.0
    %87 = vmatpush1.msra.mxu0 0.0
    %88 = vmatprep.mubr.f32.mxu0 0.0
    %89 = vmatmul.mubr.f32.gmra.mrb[0].mxu0 %v22
    %v90 = vpop.f32.mrb[0].mxu0
    %v91 = vadd.f32 0.0, %v90
    %v92 = vpop.f32.mrb[0].mxu0
    %93 = vdwg.mxu0
    %v94 = vmax.f32 %v91, 0.0
    %v95 = vlaneseq
    %v96 = vshrl.u32 %v95, 7
    %v97 = vsub.s32 0, %v96
    %v98 = vrot.slane %v19, %v97
    %vm99 = vcmask 162816
    %v101 = vsel %vm99, %v94, 0
    %vm103 = vcmask 1043456
    %v105 = vsel %vm103, %v18, 0
    %107 = vmatprep.subr.mxu0 0.0
    %108 = vmatpush1.msra.mxu0 %v16
    %109 = vmatprep.subr.mxu0 0.0
    %110 = vmatpush1.msra.mxu0 %v17
    %111 = vmatprep.subr.mxu0 0.0
    %112 = vmatpush1.msra.mxu0 %v105
    %113 = vmatprep.subr.mxu0 0.0
    %114 = vmatpush1.msra.mxu0 0.0
    %115 = vmatprep.subr.mxu0 0.0
    %116 = vmatpush1.msra.mxu0 0.0
    %117 = vmatprep.subr.mxu0 0.0
    %118 = vmatpush1.msra.mxu0 0.0
    %119 = vmatprep.subr.mxu0 0.0
    %120 = vmatpush1.msra.mxu0 0.0
    %121 = vmatprep.subr.mxu0 0.0
    %122 = vmatpush1.msra.mxu0 0.0
    %123 = vmatprep.subr.mxu0 0.0
    %124 = vmatpush1.msra.mxu0 0.0
    %125 = vmatprep.subr.mxu0 0.0
    %126 = vmatpush1.msra.mxu0 0.0
    %127 = vmatprep.subr.mxu0 0.0
    %128 = vmatpush1.msra.mxu0 0.0
    %129 = vmatprep.subr.mxu0 0.0
    %130 = vmatpush1.msra.mxu0 0.0
    %131 = vmatprep.subr.mxu0 0.0
    %132 = vmatpush1.msra.mxu0 0.0
    %133 = vmatprep.subr.mxu0 0.0
    %134 = vmatpush1.msra.mxu0 0.0
    %135 = vmatprep.subr.mxu0 0.0
    %136 = vmatpush1.msra.mxu0 0.0
    %137 = vmatprep.subr.mxu0 0.0
    %138 = vmatpush1.msra.mxu0 0.0
    %139 = vmatprep.subr.mxu0 0.0
    %140 = vmatpush1.msra.mxu0 0.0
    %141 = vmatprep.subr.mxu0 0.0
    %142 = vmatpush1.msra.mxu0 0.0
    %143 = vmatprep.subr.mxu0 0.0
    %144 = vmatpush1.msra.mxu0 0.0
    %145 = vmatprep.subr.mxu0 0.0
    %146 = vmatpush1.msra.mxu0 0.0
    %147 = vmatprep.subr.mxu0 0.0
    %148 = vmatpush1.msra.mxu0 0.0
    %149 = vmatprep.subr.mxu0 0.0
    %150 = vmatpush1.msra.mxu0 0.0
    %151 = vmatprep.subr.mxu0 0.0
    %152 = vmatpush1.msra.mxu0 0.0
    %153 = vmatprep.subr.mxu0 0.0
    %154 = vmatpush1.msra.mxu0 0.0
    %155 = vmatprep.subr.mxu0 0.0
    %156 = vmatpush1.msra.mxu0 0.0
    %157 = vmatprep.subr.mxu0 0.0
    %158 = vmatpush1.msra.mxu0 0.0
    %159 = vmatprep.subr.mxu0 0.0
    %160 = vmatpush1.msra.mxu0 0.0
    %161 = vmatprep.subr.mxu0 0.0
    %162 = vmatpush1.msra.mxu0 0.0
    %163 = vmatprep.subr.mxu0 0.0
    %164 = vmatpush1.msra.mxu0 0.0
    %165 = vmatprep.subr.mxu0 0.0
    %166 = vmatpush1.msra.mxu0 0.0
    %167 = vmatprep.subr.mxu0 0.0
    %168 = vmatpush1.msra.mxu0 0.0
    %169 = vmatprep.subr.mxu0 0.0
    %170 = vmatpush1.msra.mxu0 0.0
    %171 = vmatprep.mubr.f32.mxu0 0.0
    %172 = vmatmul.mubr.f32.gmra.mrb[0].mxu0 %v101
    %v173 = vpop.f32.mrb[0].mxu0
    %v174 = vadd.f32 %v98, %v173
    %v175 = vpop.f32.mrb[0].mxu0
    %176 = vdwg.mxu0
    %vm177 = vcmask 156672
    %v178 = vsel %vm177, %v174, 0.0
    %179 = vadd.xlane.f32.xlu0 %v178
    %v180 = vpop.xlane.xlu0 %179
    %v181 = vrot.slane %v180, 4
    %v182 = vadd.f32 %v180, %v181
    %v183 = vrot.slane %v182, 2
    %v184 = vadd.f32 %v182, %v183
    %v185 = vrot.slane %v184, 1
    %v186 = vadd.f32 %v184, %v185
    %s187 = vtos %v186
    %v188 = vstv %s187
    %v189 = vmul.f32 %v174, %v174
    %v190 = vsel %vm177, %v189, 0.0
    %191 = vadd.xlane.f32.xlu0 %v190
    %v192 = vpop.xlane.xlu0 %191
    %v193 = vrot.slane %v192, 4
    %v194 = vadd.f32 %v192, %v193
    %v195 = vrot.slane %v194, 2
    %v196 = vadd.f32 %v194, %v195
    %v197 = vrot.slane %v196, 1
    %v198 = vadd.f32 %v196, %v197
    %s199 = vtos %v198
    %v200 = vstv %s199
    %v201 = vrsqrt.pop %v200
    %v202 = vmul.f32 %v200, %v201
    %vm203 = vcmp.eq.f32.partialorder %v200, inf
    %v204 = vsel %vm203, %v200, %v202
    %vm205 = vcmp.eq.f32.partialorder %v200, 0.0
    %v206 = vand.u32 %v200, 2147483648
    %v207 = vsel %vm205, %v206, %v204
    %v209 = vshra.s32 %v207, 23
    %v210 = vand.u32 %v209, 255
    %v211 = vsub.s32 %v210, 127
    %v212 = vand.u32 %v207, 8388607
    %vm213 = vcmp.ne.s32.totalorder %v212, 0
    %v214 = vsel %vm213, 1, 0
    %v215 = vadd.s32 %v211, %v214
    %vm216 = vcmp.gt.s32.totalorder %v215, 0
    %v217 = vsel %vm216, %v215, 0
    %v218 = vshra.s32 %v217, 1
    %v219 = vsub.s32 %v217, %v218
    %v220 = vsub.s32 127, %v218
    %v221 = vshll.u32 %v220, 23
    %v223 = vsub.s32 127, %v219
    %v224 = vshll.u32 %v223, 23
    %v226 = vmul.f32 %v207, %v221
    %v227 = vmul.f32 %v226, %v224
    %v228 = vmul.f32 %v188, %v221
    %v229 = vmul.f32 %v228, %v224
    %vm230 = vcmp.lt.f32.partialorder %v227, 0.8
    %v231 = vsel %vm230, 10.0, 1.0
    %v232 = vmul.f32 %v229, %v231
    %v233 = vadd.f32 %v232, 0.0
    %s234 = vtos %v233
    %s235 = scalar_lea.smem [#allocation2], 0
    %236 = sst [smem:[%s235]] %s234
    // Predicated region
    $region10: #{tpu_custom_call.1} parent=1 // pred_check
      _
    $region11: #{tpu_custom_call.1} parent=1 // pred_check_branch
      %238 = sbr.rel (0) target = $region13
    $region12: #{tpu_custom_call.1} parent=1 // pred_region
      %s240 = ssub.s32 16, 16
      %241 = vsyncadd [#allocation3], %s240
      %244 = dma.smem_to_hbm [#allocation2], 16, %s2, [#allocation3]
    $region13: #{tpu_custom_call.1} parent=1 // pred_fallthru
      _
    // Predicated region
    $region14: #{tpu_custom_call.1} parent=1 // pred_check
      _
    $region15: #{tpu_custom_call.1} parent=1 // pred_check_branch
      %246 = sbr.rel (0) target = $region17
    $region16: #{tpu_custom_call.1} parent=1 // pred_region
      %247 = dma.done [#allocation3], 16
    $region17: #{tpu_custom_call.1} parent=1 // pred_fallthru
      _
    %248 = sfence
    %249 = vsyncpa [#allocation3], 1

</llo_original>
